<compile_context>
chip_gen: v6e
topology: v6e:2x2x1
jax: 0.10.0
libtpu: 0.0.40
codegen_flags: <defaults>
</compile_context>

<pallas_src>
from functools import partial

import numpy as np
import jax
import jax.numpy as jnp
from jax.experimental import pallas as pl
from jax.experimental.pallas import tpu as pltpu


# --------------------------------------------------------------------------- #
# Fused kernel: conv1 (shift-grouped) + BN + GELU + conv2 (rolled taps) + SE
# --------------------------------------------------------------------------- #
def _stem_kernel(x_ref, w_ref, c_ref, o_ref, *,
                 Cin, C1, C2, Cse, Wp, SpP, G, inv_hw):
    # x_ref : (4*Cin+1, G*SpP) bf16  4 stride-2 input planes + validity-mask row
    # w_ref : (C2, 4*(4*Cin) + 9*C1) bf16  conv1 shift-group weights | conv2 weights
    # c_ref : (C2+1, 3+2*Cse) f32    folded BN scale/shift | w_red^T | w_exp | b_exp | b_red
    # o_ref : (G, C2, SpP)    f32
    K1 = 4 * Cin                      # contraction width of one conv1 shift group
    L = G * SpP                       # lanes in this block (G images side by side)

    planes = x_ref[0:4 * Cin, :]                                    # (4*Cin, L) bf16
    vmask = x_ref[4 * Cin:4 * Cin + 1, :].astype(jnp.float32)       # (1, L) 1.0 on valid pixels

    # ---- conv1: 4 shift-grouped MXU matmuls + XLU lane rolls of the results ----
    # (roll commutes with a lane-wise matmul, so no im2col buffer is built)
    y1 = None
    for sy in range(2):
        for sx in range(2):
            s = sy * 2 + sx
            z = jnp.dot(w_ref[0:C1, s * K1:(s + 1) * K1], planes,
                        preferred_element_type=jnp.float32)         # (C1, L)
            d = sy * Wp + sx
            if d:
                z = pltpu.roll(z, shift=(-d) % L, axis=1)
            y1 = z if y1 is None else y1 + z

    # ---- BatchNorm (eval, folded) + tanh-approx GELU + validity mask ----
    y1 = y1 * c_ref[0:C1, 0:1] + c_ref[0:C1, 1:2]
    y1 = jax.nn.gelu(y1, approximate=True)
    y1 = y1 * vmask          # zero the halo row/col and lane padding -> conv2 padding & SE

    # ---- conv2: 9 taps via lane rolls of y1, one K=9*C1 MXU matmul ----
    taps = []
    for ty in range(3):
        for tx in range(3):
            d = (ty - 1) * Wp + (tx - 1)
            taps.append(y1 if d == 0 else pltpu.roll(y1, shift=(-d) % L, axis=1))
    p2 = jnp.concatenate(taps, axis=0).astype(jnp.bfloat16)         # (9*C1, L)
    y2 = jnp.dot(w_ref[0:C2, 4 * K1:4 * K1 + 9 * C1], p2,
                 preferred_element_type=jnp.float32)                # (C2, L)

    # ---- SE (per image): masked mean + two tiny 1x1 convs on the VPU/XLU ----
    w_redT = c_ref[0:C2, 2:2 + Cse]                                 # (C2, Cse)
    w_expM = c_ref[0:C2, 2 + Cse:2 + 2 * Cse]                       # (C2, Cse)
    b_red = c_ref[C2:C2 + 1, 2:2 + Cse]                             # (1, Cse)
    b_exp = c_ref[0:C2, 2 + 2 * Cse:3 + 2 * Cse]                    # (C2, 1)
    for g in range(G):
        y2g = y2[:, g * SpP:(g + 1) * SpP]                          # (C2, SpP) lane-aligned
        mg = vmask[:, g * SpP:(g + 1) * SpP]
        m = jnp.sum(y2g * mg, axis=1, keepdims=True) * inv_hw       # (C2, 1) masked mean
        s_red = jnp.maximum(jnp.sum(w_redT * m, axis=0, keepdims=True) + b_red, 0.0)  # (1, Cse)
        s_exp = jnp.sum(w_expM * s_red, axis=1, keepdims=True) + b_exp                # (C2, 1)
        gate = jax.nn.sigmoid(s_exp)
        o_ref[g] = (y2g * gate).astype(o_ref.dtype)


# --------------------------------------------------------------------------- #
# Wrapper
# --------------------------------------------------------------------------- #
def stem_forward(x_nchw, params, norm_eps=1e-5):
    (w1, gamma, beta, rmean, rvar, w2, w_red, b_red, w_exp, b_exp) = params
    N, Cin, H, W = x_nchw.shape
    C1 = w1.shape[0]
    C2 = w2.shape[0]
    Cse = w_red.shape[0]
    k = w1.shape[-1]
    assert k == 3 and w2.shape[-1] == 3

    # conv(3x3, s=2, p=1) output size; extended plane layout is (H1+1, W1+1)
    H1 = (H - 1) // 2 + 1
    W1 = (W - 1) // 2 + 1
    Hp, Wp = H1 + 1, W1 + 1
    Sp = Hp * Wp
    # lane padding so negative conv2 shifts wrap into zeroed lanes (needs >= Wp+1 slack)
    SpP = int(pl.cdiv(Sp + Wp + 1, 128) * 128)

    # ---- batch folding: G images per grid step, >=2 parallel steps when N>=2 (v7x) ----
    LANE_BUDGET = 8192                       # lanes per step (keeps block well under 32 MiB)
    G = max(1, min(N, LANE_BUDGET // SpP))
    if N >= 2:
        G = min(G, -(-N // 2))               # keep at least 2 grid steps
    num_steps = -(-N // G)
    N_pad = num_steps * G
    L = G * SpP

    # ---- deinterleave padded input into the 4 stride-2 planes (no 9x im2col in HBM) ----
    xp = jnp.pad(x_nchw, ((0, 0), (0, 0), (1, 1), (1, 1)))
    planes = []
    for py in range(2):
        for px in range(2):
            pln = xp[:, :, py::2, px::2][:, :, :Hp, :Wp]
            pln = jnp.pad(pln, ((0, 0), (0, 0),
                                (0, Hp - pln.shape[2]), (0, Wp - pln.shape[3])))
            planes.append(pln)
    planes = jnp.stack(planes, axis=1).reshape(N, 4 * Cin, Sp)
    planes = jnp.pad(planes, ((0, 0), (0, 0), (0, SpP - Sp)))

    # per-image validity mask over the extended layout (valid conv-output positions)
    col = np.arange(SpP)
    valid = ((col < Sp) & ((col // Wp) < H1) & ((col % Wp) < W1)).astype(np.float32)
    mrow = jnp.broadcast_to(jnp.asarray(valid)[None, None, :], (N, 1, SpP))

    xin = jnp.concatenate([planes, mrow], axis=1).astype(jnp.bfloat16)   # (N, 4*Cin+1, SpP)
    xin = jnp.pad(xin, ((0, N_pad - N), (0, 0), (0, 0)))
    xin = jnp.transpose(xin, (1, 0, 2)).reshape(4 * Cin + 1, N_pad * SpP)

    # ---- pack conv weights: 4 conv1 shift-group matrices | conv2 (C2, 9*C1) ----
    K1 = 4 * Cin
    w1g = jnp.zeros((4, C1, K1), jnp.float32)
    for dy in range(3):
        for dx in range(3):
            s = (dy // 2) * 2 + (dx // 2)          # shift group (no within-group collisions)
            p = (dy % 2) * 2 + (dx % 2)            # source plane
            w1g = w1g.at[s, :, p * Cin:(p + 1) * Cin].set(w1[:, :, dy, dx])
    w1g = jnp.transpose(w1g, (1, 0, 2)).reshape(C1, 4 * K1)
    w2_mat = jnp.transpose(w2, (0, 2, 3, 1)).reshape(C2, 9 * C1)
    wpack = jnp.zeros((C2, 4 * K1 + 9 * C1), jnp.float32)
    wpack = wpack.at[:C1, :4 * K1].set(w1g).at[:, 4 * K1:].set(w2_mat)
    wpack = wpack.astype(jnp.bfloat16)

    # ---- pack the small f32 constants (folded BN + SE) into ONE operand ----
    ncol = 3 + 2 * Cse
    inv_std = gamma / jnp.sqrt(rvar + norm_eps)
    cpack = jnp.zeros((C2 + 1, ncol), jnp.float32)
    cpack = cpack.at[:C1, 0].set(inv_std)
    cpack = cpack.at[:C1, 1].set(beta - rmean * inv_std)
    cpack = cpack.at[:C2, 2:2 + Cse].set(jnp.transpose(w_red))
    cpack = cpack.at[:C2, 2 + Cse:2 + 2 * Cse].set(w_exp)
    cpack = cpack.at[C2, 2:2 + Cse].set(b_red)
    cpack = cpack.at[:C2, 2 + 2 * Cse].set(b_exp)

    kernel = partial(_stem_kernel, Cin=Cin, C1=C1, C2=C2, Cse=Cse,
                     Wp=Wp, SpP=SpP, G=G, inv_hw=float(1.0 / (H1 * W1)))

    L_tot = N_pad * SpP
    flops = 2 * L_tot * (C1 * 4 * K1 + C2 * 9 * C1) + 4 * N_pad * C2 * Cse
    bytes_accessed = (xin.size * 2 + wpack.size * 2 + cpack.size * 4
                      + N_pad * C2 * SpP * 4)
    cost = pl.CostEstimate(flops=int(flops),
                           transcendentals=int(L_tot * C1 + N_pad * C2),
                           bytes_accessed=int(bytes_accessed))

    out = pl.pallas_call(
        kernel,
        out_shape=jax.ShapeDtypeStruct((N_pad, C2, SpP), jnp.float32),
        grid=(num_steps,),
        in_specs=[
            pl.BlockSpec((4 * Cin + 1, L), lambda n: (0, n)),          # planes + mask row
            pl.BlockSpec((C2, 4 * K1 + 9 * C1), lambda n: (0, 0)),     # packed conv weights
            pl.BlockSpec((C2 + 1, ncol), lambda n: (0, 0)),            # packed BN/SE constants
        ],
        out_specs=pl.BlockSpec((G, C2, SpP), lambda n: (n, 0, 0)),
        compiler_params=pltpu.CompilerParams(
            dimension_semantics=("parallel",),
            vmem_limit_bytes=32 * 1024 * 1024,
        ),
        cost_estimate=cost,
    )(xin, wpack, cpack)

    # (N_pad, C2, SpP) extended layout -> drop padding/halo -> NCHW
    out = out[:N, :, :Sp].reshape(N, C2, Hp, Wp)[:, :, :H1, :W1]
    return out


# --------------------------------------------------------------------------- #
# Pure-JAX reference (same approximations except f32 matmuls) for a self-check
# --------------------------------------------------------------------------- #
def _stem_reference(x, params, norm_eps=1e-5):
    (w1, gamma, beta, rmean, rvar, w2, w_red, b_red, w_exp, b_exp) = params
    dn = ("NCHW", "OIHW", "NCHW")
    y = jax.lax.conv_general_dilated(x, w1, (2, 2), ((1, 1), (1, 1)), dimension_numbers=dn)
    inv = gamma / jnp.sqrt(rvar + norm_eps)
    y = y * inv[None, :, None, None] + (beta - rmean * inv)[None, :, None, None]
    y = jax.nn.gelu(y, approximate=True)
    y = jax.lax.conv_general_dilated(y, w2, (1, 1), ((1, 1), (1, 1)), dimension_numbers=dn)
    m = jnp.mean(y, axis=(2, 3))                         # (N, C2)
    s = jnp.maximum(m @ w_red.T + b_red, 0.0)            # (N, Cse)
    s = s @ w_exp.T + b_exp                              # (N, C2)
    g = jax.nn.sigmoid(s)[:, :, None, None]
    return y * g


# --------------------------------------------------------------------------- #
# Main
# --------------------------------------------------------------------------- #
if __name__ == "__main__":
    # Small shapes consistent with the module: in_chs=4, out_chs=(8, 16), se_ratio=0.25
    N, Cin, H, W = 2, 4, 16, 16
    C1, C2 = 8, 16
    Cse = int(C2 * 0.25)
    k = 3

    key = jax.random.PRNGKey(0)
    ks = jax.random.split(key, 11)
    x = jax.random.normal(ks[0], (N, Cin, H, W), jnp.float32)

    w1 = 0.1 * jax.random.normal(ks[1], (C1, Cin, k, k), jnp.float32)        # conv1.weight
    gamma = 1.0 + 0.1 * jax.random.normal(ks[2], (C1,), jnp.float32)         # norm1.weight
    beta = 0.1 * jax.random.normal(ks[3], (C1,), jnp.float32)                # norm1.bias
    rmean = 0.1 * jax.random.normal(ks[4], (C1,), jnp.float32)               # norm1.running_mean
    rvar = jnp.abs(jax.random.normal(ks[5], (C1,), jnp.float32)) + 0.5       # norm1.running_var
    w2 = 0.1 * jax.random.normal(ks[6], (C2, C1, k, k), jnp.float32)         # conv2.weight
    w_red = 0.1 * jax.random.normal(ks[7], (Cse, C2), jnp.float32)           # se_reduce.weight
    b_red = 0.1 * jax.random.normal(ks[8], (Cse,), jnp.float32)              # se_reduce.bias
    w_exp = 0.1 * jax.random.normal(ks[9], (C2, Cse), jnp.float32)           # se_expand.weight
    b_exp = 0.1 * jax.random.normal(ks[10], (C2,), jnp.float32)              # se_expand.bias

    params = (w1, gamma, beta, rmean, rvar, w2, w_red, b_red, w_exp, b_exp)

    out = jax.jit(stem_forward)(x, params)
    jax.block_until_ready(out)
    assert out.shape == (N, C2, H // 2, W // 2), out.shape

    # Self-check against a pure-JAX f32 reference (bf16 MXU inputs -> loose tolerance).
    ref = _stem_reference(x, params)
    np.testing.assert_allclose(np.asarray(out), np.asarray(ref), rtol=5e-2, atol=5e-2)

    print("KERNEL_OK")
</pallas_src>

<mosaic_0001>
module attributes {stable_mosaic.version = 11 : i64} {
  func.func @_stem_kernel(%arg0: i32, %arg1: memref<17x128xbf16, #tpu.memory_space<vmem>>, %arg2: memref<16x136xbf16, #tpu.memory_space<vmem>>, %arg3: memref<17x11xf32, #tpu.memory_space<vmem>>, %arg4: memref<1x16x128xf32, #tpu.memory_space<vmem>>) attributes {dimension_semantics = [#tpu.dimension_semantics<parallel>], iteration_bounds = array<i64: 2>, scalar_prefetch = 0 : i64, scratch_operands = 0 : i64, tpu.core_type = #tpu.core_type<tc>, window_params = [{transform_indices = @transform_0, window_bounds = array<i64: 17, 128>}, {pipeline_mode = #tpu.pipeline_mode<synchronous>, transform_indices = @transform_1, window_bounds = array<i64: 16, 136>}, {pipeline_mode = #tpu.pipeline_mode<synchronous>, transform_indices = @transform_2, window_bounds = array<i64: 17, 11>}, {transform_indices = @transform_3, window_bounds = array<i64: 1, 16, 128>}]} {
    %c0 = arith.constant 0 : index
    %c0_0 = arith.constant 0 : index
    %0 = vector.load %arg1[%c0, %c0_0] : memref<17x128xbf16, #tpu.memory_space<vmem>>, vector<16x128xbf16>
    %c16 = arith.constant 16 : index
    %c0_1 = arith.constant 0 : index
    %1 = vector.load %arg1[%c16, %c0_1] : memref<17x128xbf16, #tpu.memory_space<vmem>>, vector<1x128xbf16>
    %2 = arith.extf %1 : vector<1x128xbf16> to vector<1x128xf32>
    %c0_2 = arith.constant 0 : index
    %c0_3 = arith.constant 0 : index
    %3 = vector.load %arg2[%c0_2, %c0_3] : memref<16x136xbf16, #tpu.memory_space<vmem>>, vector<8x16xbf16>
    %cst = arith.constant dense<0.000000e+00> : vector<8x128xf32>
    %4 = tpu.matmul %3, %0, %cst {dimension_numbers = #tpu.dot_dimension_numbers<[1], [0], [0], [1], [0, 0, 1, 1], [], []>} : vector<8x16xbf16>, vector<16x128xbf16>, vector<8x128xf32> -> vector<8x128xf32>
    %c0_4 = arith.constant 0 : index
    %c16_5 = arith.constant 16 : index
    %5 = vector.load %arg2[%c0_4, %c16_5] : memref<16x136xbf16, #tpu.memory_space<vmem>>, vector<8x16xbf16>
    %cst_6 = arith.constant dense<0.000000e+00> : vector<8x128xf32>
    %6 = tpu.matmul %5, %0, %cst_6 {dimension_numbers = #tpu.dot_dimension_numbers<[1], [0], [0], [1], [0, 0, 1, 1], [], []>} : vector<8x16xbf16>, vector<16x128xbf16>, vector<8x128xf32> -> vector<8x128xf32>
    %c127_i32 = arith.constant 127 : i32
    %7 = tpu.dynamic_rotate %6 by %c127_i32 dim 1 : vector<8x128xf32>, i32 -> vector<8x128xf32>
    %8 = arith.addf %4, %7 : vector<8x128xf32>
    %c0_7 = arith.constant 0 : index
    %c32 = arith.constant 32 : index
    %9 = vector.load %arg2[%c0_7, %c32] : memref<16x136xbf16, #tpu.memory_space<vmem>>, vector<8x16xbf16>
    %cst_8 = arith.constant dense<0.000000e+00> : vector<8x128xf32>
    %10 = tpu.matmul %9, %0, %cst_8 {dimension_numbers = #tpu.dot_dimension_numbers<[1], [0], [0], [1], [0, 0, 1, 1], [], []>} : vector<8x16xbf16>, vector<16x128xbf16>, vector<8x128xf32> -> vector<8x128xf32>
    %c119_i32 = arith.constant 119 : i32
    %11 = tpu.dynamic_rotate %10 by %c119_i32 dim 1 : vector<8x128xf32>, i32 -> vector<8x128xf32>
    %12 = arith.addf %8, %11 : vector<8x128xf32>
    %c0_9 = arith.constant 0 : index
    %c48 = arith.constant 48 : index
    %13 = vector.load %arg2[%c0_9, %c48] : memref<16x136xbf16, #tpu.memory_space<vmem>>, vector<8x16xbf16>
    %cst_10 = arith.constant dense<0.000000e+00> : vector<8x128xf32>
    %14 = tpu.matmul %13, %0, %cst_10 {dimension_numbers = #tpu.dot_dimension_numbers<[1], [0], [0], [1], [0, 0, 1, 1], [], []>} : vector<8x16xbf16>, vector<16x128xbf16>, vector<8x128xf32> -> vector<8x128xf32>
    %c118_i32 = arith.constant 118 : i32
    %15 = tpu.dynamic_rotate %14 by %c118_i32 dim 1 : vector<8x128xf32>, i32 -> vector<8x128xf32>
    %16 = arith.addf %12, %15 : vector<8x128xf32>
    %c0_11 = arith.constant 0 : index
    %c0_12 = arith.constant 0 : index
    %17 = vector.load %arg3[%c0_11, %c0_12] : memref<17x11xf32, #tpu.memory_space<vmem>>, vector<8x1xf32>
    %18 = vector.broadcast %17 : vector<8x1xf32> to vector<8x128xf32>
    %19 = arith.mulf %16, %18 : vector<8x128xf32>
    %c0_13 = arith.constant 0 : index
    %c1 = arith.constant 1 : index
    %20 = vector.load %arg3[%c0_13, %c1] : memref<17x11xf32, #tpu.memory_space<vmem>>, vector<8x1xf32>
    %21 = vector.broadcast %20 : vector<8x1xf32> to vector<8x128xf32>
    %22 = arith.addf %19, %21 : vector<8x128xf32>
    %23 = arith.mulf %22, %22 : vector<8x128xf32>
    %24 = arith.mulf %22, %23 : vector<8x128xf32>
    %cst_14 = arith.constant 4.471500e-02 : f32
    %25 = vector.broadcast %cst_14 : f32 to vector<8x128xf32>
    %26 = arith.mulf %25, %24 : vector<8x128xf32>
    %27 = arith.addf %22, %26 : vector<8x128xf32>
    %cst_15 = arith.constant 0.797884583 : f32
    %28 = vector.broadcast %cst_15 : f32 to vector<8x128xf32>
    %29 = arith.mulf %28, %27 : vector<8x128xf32>
    %30 = math.tanh %29 : vector<8x128xf32>
    %cst_16 = arith.constant 1.000000e+00 : f32
    %31 = vector.broadcast %cst_16 : f32 to vector<8x128xf32>
    %32 = arith.addf %31, %30 : vector<8x128xf32>
    %cst_17 = arith.constant 5.000000e-01 : f32
    %33 = vector.broadcast %cst_17 : f32 to vector<8x128xf32>
    %34 = arith.mulf %33, %32 : vector<8x128xf32>
    %35 = arith.mulf %22, %34 : vector<8x128xf32>
    %36 = vector.broadcast %2 : vector<1x128xf32> to vector<8x128xf32>
    %37 = arith.mulf %35, %36 : vector<8x128xf32>
    %c10_i32 = arith.constant 10 : i32
    %38 = tpu.dynamic_rotate %37 by %c10_i32 dim 1 : vector<8x128xf32>, i32 -> vector<8x128xf32>
    %c9_i32 = arith.constant 9 : i32
    %39 = tpu.dynamic_rotate %37 by %c9_i32 dim 1 : vector<8x128xf32>, i32 -> vector<8x128xf32>
    %c8_i32 = arith.constant 8 : i32
    %40 = tpu.dynamic_rotate %37 by %c8_i32 dim 1 : vector<8x128xf32>, i32 -> vector<8x128xf32>
    %c1_i32 = arith.constant 1 : i32
    %41 = tpu.dynamic_rotate %37 by %c1_i32 dim 1 : vector<8x128xf32>, i32 -> vector<8x128xf32>
    %c127_i32_18 = arith.constant 127 : i32
    %42 = tpu.dynamic_rotate %37 by %c127_i32_18 dim 1 : vector<8x128xf32>, i32 -> vector<8x128xf32>
    %c120_i32 = arith.constant 120 : i32
    %43 = tpu.dynamic_rotate %37 by %c120_i32 dim 1 : vector<8x128xf32>, i32 -> vector<8x128xf32>
    %c119_i32_19 = arith.constant 119 : i32
    %44 = tpu.dynamic_rotate %37 by %c119_i32_19 dim 1 : vector<8x128xf32>, i32 -> vector<8x128xf32>
    %c118_i32_20 = arith.constant 118 : i32
    %45 = tpu.dynamic_rotate %37 by %c118_i32_20 dim 1 : vector<8x128xf32>, i32 -> vector<8x128xf32>
    %46 = tpu.concatenate %38, %39, %40, %41, %37, %42, %43, %44, %45 in 0 : vector<8x128xf32>, vector<8x128xf32>, vector<8x128xf32>, vector<8x128xf32>, vector<8x128xf32>, vector<8x128xf32>, vector<8x128xf32>, vector<8x128xf32>, vector<8x128xf32> -> vector<72x128xf32>
    %47 = arith.truncf %46 : vector<72x128xf32> to vector<72x128xbf16>
    %c0_21 = arith.constant 0 : index
    %c64 = arith.constant 64 : index
    %48 = vector.load %arg2[%c0_21, %c64] : memref<16x136xbf16, #tpu.memory_space<vmem>>, vector<16x72xbf16>
    %cst_22 = arith.constant dense<0.000000e+00> : vector<16x128xf32>
    %49 = tpu.matmul %48, %47, %cst_22 {dimension_numbers = #tpu.dot_dimension_numbers<[1], [0], [0], [1], [0, 0, 1, 1], [], []>} : vector<16x72xbf16>, vector<72x128xbf16>, vector<16x128xf32> -> vector<16x128xf32>
    %c0_23 = arith.constant 0 : index
    %c2 = arith.constant 2 : index
    %50 = vector.load %arg3[%c0_23, %c2] : memref<17x11xf32, #tpu.memory_space<vmem>>, vector<16x4xf32>
    %c0_24 = arith.constant 0 : index
    %c6 = arith.constant 6 : index
    %51 = vector.load %arg3[%c0_24, %c6] : memref<17x11xf32, #tpu.memory_space<vmem>>, vector<16x4xf32>
    %c16_25 = arith.constant 16 : index
    %c2_26 = arith.constant 2 : index
    %52 = vector.load %arg3[%c16_25, %c2_26] : memref<17x11xf32, #tpu.memory_space<vmem>>, vector<1x4xf32>
    %c0_27 = arith.constant 0 : index
    %c10 = arith.constant 10 : index
    %53 = vector.load %arg3[%c0_27, %c10] : memref<17x11xf32, #tpu.memory_space<vmem>>, vector<16x1xf32>
    %54 = vector.broadcast %2 : vector<1x128xf32> to vector<16x128xf32>
    %55 = arith.mulf %49, %54 : vector<16x128xf32>
    %cst_28 = arith.constant dense<0.000000e+00> : vector<16xf32>
    %56 = vector.multi_reduction <add>, %55, %cst_28 [1] : vector<16x128xf32> to vector<16xf32>
    %57 = vector.shape_cast %56 : vector<16xf32> to vector<16x1xf32>
    %cst_29 = arith.constant 1.562500e-02 : f32
    %58 = vector.broadcast %cst_29 : f32 to vector<16x1xf32>
    %59 = arith.mulf %57, %58 : vector<16x1xf32>
    %60 = vector.broadcast %59 : vector<16x1xf32> to vector<16x4xf32>
    %61 = arith.mulf %50, %60 : vector<16x4xf32>
    %cst_30 = arith.constant dense<0.000000e+00> : vector<4xf32>
    %62 = vector.multi_reduction <add>, %61, %cst_30 [0] : vector<16x4xf32> to vector<4xf32>
    %63 = vector.shape_cast %62 : vector<4xf32> to vector<1x4xf32>
    %64 = arith.addf %63, %52 : vector<1x4xf32>
    %cst_31 = arith.constant 0.000000e+00 : f32
    %65 = vector.broadcast %cst_31 : f32 to vector<1x4xf32>
    %66 = arith.maximumf %64, %65 : vector<1x4xf32>
    %67 = vector.broadcast %66 : vector<1x4xf32> to vector<16x4xf32>
    %68 = arith.mulf %51, %67 : vector<16x4xf32>
    %cst_32 = arith.constant dense<0.000000e+00> : vector<16xf32>
    %69 = vector.multi_reduction <add>, %68, %cst_32 [1] : vector<16x4xf32> to vector<16xf32>
    %70 = vector.shape_cast %69 : vector<16xf32> to vector<16x1xf32>
    %71 = arith.addf %70, %53 : vector<16x1xf32>
    %72 = arith.negf %71 : vector<16x1xf32>
    %73 = math.exp %72 : vector<16x1xf32>
    %cst_33 = arith.constant 1.000000e+00 : f32
    %74 = vector.broadcast %cst_33 : f32 to vector<16x1xf32>
    %75 = arith.addf %74, %73 : vector<16x1xf32>
    %76 = arith.divf %74, %75 : vector<16x1xf32>
    %77 = vector.broadcast %76 : vector<16x1xf32> to vector<16x128xf32>
    %78 = arith.mulf %49, %77 : vector<16x128xf32>
    %c0_34 = arith.constant 0 : index
    %c0_35 = arith.constant 0 : index
    %c0_36 = arith.constant 0 : index
    %79 = vector.load %arg4[%c0_34, %c0_35, %c0_36] : memref<1x16x128xf32, #tpu.memory_space<vmem>>, vector<1x16x128xf32>
    %80 = vector.shape_cast %79 : vector<1x16x128xf32> to vector<16x128xf32>
    %81 = vector.shape_cast %78 : vector<16x128xf32> to vector<1x16x128xf32>
    tpu.vector_store %arg4[%c0_34, %c0_35, %c0_36], %81 {strides = array<i32>} : memref<1x16x128xf32, #tpu.memory_space<vmem>>, vector<1x16x128xf32>,
    return
  }
  func.func @transform_0(%arg0: i32) -> (i32, i32) {
    %c0_i32 = arith.constant 0 : i32
    %c0_i32_0 = arith.constant 0 : i32
    return %c0_i32, %arg0 : i32, i32
  }
  func.func @transform_1(%arg0: i32) -> (i32, i32) {
    %c0_i32 = arith.constant 0 : i32
    %c0_i32_0 = arith.constant 0 : i32
    %c0_i32_1 = arith.constant 0 : i32
    return %c0_i32, %c0_i32_0 : i32, i32
  }
  func.func @transform_2(%arg0: i32) -> (i32, i32) {
    %c0_i32 = arith.constant 0 : i32
    %c0_i32_0 = arith.constant 0 : i32
    %c0_i32_1 = arith.constant 0 : i32
    return %c0_i32, %c0_i32_0 : i32, i32
  }
  func.func @transform_3(%arg0: i32) -> (i32, i32, i32) {
    %c0_i32 = arith.constant 0 : i32
    %c0_i32_0 = arith.constant 0 : i32
    %c0_i32_1 = arith.constant 0 : i32
    return %arg0, %c0_i32, %c0_i32_0 : i32, i32, i32
  }
}

</mosaic_0001>

<llo_original>
// kernel: stem_forward.1
$region0: #{stem_forward.1}
  #allocation0 [shape = 'u32[]', space=smem, size = 0x4, offset = 0x4, fixed_abs, tag = 'smem constant byte address 0x4 - core index']
  #allocation1 [shape = 'u32[144,128]{1,0:T(1,128)}', space=vmem, size = 0x12000, scoped, tag = 'internal scratch']
  %s0 = inlined_call_operand.vmem [shape: bf16[17,256], index: 0, kind: input, shape index: {}]
  %s1 = inlined_call_operand.vmem [shape: bf16[16,136], index: 1, kind: input, shape index: {}]
  %s2 = inlined_call_operand.vmem [shape: f32[17,11], index: 2, kind: input, shape index: {}]
  %s3 = inlined_call_operand.vmem [shape: f32[2,16,128], index: 3, kind: output, shape index: {}]
  %s4 = sld [smem:[#allocation0]]
  $region86: #{stem_forward.1} parent=0
    _
  %s6 = ssub.s32 1, %s4
  %s7 = scalar_select 0, %s6, %s4
  $region1: #{stem_forward.1} parent=0
    #allocation2 [shape = 'u8[12288]{0}', space=vmem, size = 0x3000, scoped, tag = 'input window, operand 0']
    loop: start=0, step=1, limit=4
    $region2: #{stem_forward.1} parent=1 // loop_pre_header
      _
    $region3: #{stem_forward.1} parent=1 // loop_header
      %s9 = sphi 0, %s13
      %p10 = scmp.ge.s32.totalorder %s9, 4
      %s19 = sphi 0, %s21
      %s22 = sphi 0, %s19
      %s23 = sphi 0, %s22
      %s39 = sphi 0, %s23
      %s43 = sphi 0, %s43
      %s45 = sphi 0, %s43
      %s46 = sphi 0, %s45
      %s60 = sphi 0, %s46
      %s64 = sphi 0, %s64
      %s66 = sphi 0, %s64
      %s67 = sphi 0, %s66
      %s81 = sphi 0, %s67
      %s87 = sphi 0, %s89
      %s90 = sphi 0, %s87
      %s91 = sphi 0, %s90
      %s107 = sphi 0, %s91
    $region4: #{stem_forward.1} parent=1 // loop_header_branch
      %12 = sbr.rel (%p10) target = $region8
    $region5: #{stem_forward.1} parent=1 // loop_body
      %s14 = ssub.s32 %s9, 1
      %s15 = ssub.s32 %s9, 2
      %s16 = sadd.s32 %s9, 1
      %s17 = ssub.s32 %s9, %s16
      %p18 = scmp.eq.s32.totalorder %s17, 0
      %s20 = sadd.s32 %s19, 1
      %s21 = scalar_select %p18, %s19, %s20
      %p24 = pneg %p18
      %p25 = scmp.eq.s32.totalorder %s9, 1
      %p26 = por %p24, %p25
      %p27 = scmp.ne.s32.totalorder %s19, %s22
      %p28 = scmp.eq.s32.totalorder %s9, 0
      %p29 = por %p27, %p28
      %p30 = scmp.ne.s32.totalorder %s19, %s22
      %p31 = scmp.eq.s32.totalorder %s14, 1
      %p32 = por %p30, %p31
      %p33 = scmp.ne.s32.totalorder %s22, %s23
      %p34 = scmp.eq.s32.totalorder %s14, 0
      %p35 = por %p33, %p34
      %p36 = scmp.ne.s32.totalorder %s22, %s23
      %p37 = scmp.eq.s32.totalorder %s15, 1
      %p38 = por %p36, %p37
      %p40 = scmp.ne.s32.totalorder %s23, %s39
      %p41 = scmp.eq.s32.totalorder %s15, 0
      %p42 = por %p40, %p41
      %s44 = sadd.s32 %s43, 1
      %p47 = scmp.eq.s32.totalorder %s9, 1
      %p48 = scmp.ne.s32.totalorder %s43, %s45
      %p49 = scmp.eq.s32.totalorder %s9, 0
      %p50 = por %p48, %p49
      %p51 = scmp.ne.s32.totalorder %s43, %s45
      %p52 = scmp.eq.s32.totalorder %s14, 1
      %p53 = por %p51, %p52
      %p54 = scmp.ne.s32.totalorder %s45, %s46
      %p55 = scmp.eq.s32.totalorder %s14, 0
      %p56 = por %p54, %p55
      %p57 = scmp.ne.s32.totalorder %s45, %s46
      %p58 = scmp.eq.s32.totalorder %s15, 1
      %p59 = por %p57, %p58
      %p61 = scmp.ne.s32.totalorder %s46, %s60
      %p62 = scmp.eq.s32.totalorder %s15, 0
      %p63 = por %p61, %p62
      %s65 = sadd.s32 %s64, 1
      %p68 = scmp.eq.s32.totalorder %s9, 1
      %p69 = scmp.ne.s32.totalorder %s64, %s66
      %p70 = scmp.eq.s32.totalorder %s9, 0
      %p71 = por %p69, %p70
      %p72 = scmp.ne.s32.totalorder %s64, %s66
      %p73 = scmp.eq.s32.totalorder %s14, 1
      %p74 = por %p72, %p73
      %p75 = scmp.ne.s32.totalorder %s66, %s67
      %p76 = scmp.eq.s32.totalorder %s14, 0
      %p77 = por %p75, %p76
      %p78 = scmp.ne.s32.totalorder %s66, %s67
      %p79 = scmp.eq.s32.totalorder %s15, 1
      %p80 = por %p78, %p79
      %p82 = scmp.ne.s32.totalorder %s67, %s81
      %p83 = scmp.eq.s32.totalorder %s15, 0
      %p84 = por %p82, %p83
      %s85 = ssub.s32 %s9, %s16
      %p86 = scmp.eq.s32.totalorder %s85, 0
      %s88 = sadd.s32 %s87, 1
      %s89 = scalar_select %p86, %s87, %s88
      %p92 = pneg %p86
      %p93 = scmp.eq.s32.totalorder %s9, 1
      %p94 = por %p92, %p93
      %p95 = scmp.ne.s32.totalorder %s87, %s90
      %p96 = scmp.eq.s32.totalorder %s9, 0
      %p97 = por %p95, %p96
      %p98 = scmp.ne.s32.totalorder %s87, %s90
      %p99 = scmp.eq.s32.totalorder %s14, 1
      %p100 = por %p98, %p99
      %p101 = scmp.ne.s32.totalorder %s90, %s91
      %p102 = scmp.eq.s32.totalorder %s14, 0
      %p103 = por %p101, %p102
      %p104 = scmp.ne.s32.totalorder %s90, %s91
      %p105 = scmp.eq.s32.totalorder %s15, 1
      %p106 = por %p104, %p105
      %p108 = scmp.ne.s32.totalorder %s91, %s107
      %p109 = scmp.eq.s32.totalorder %s15, 0
      %p110 = por %p108, %p109
      %p111 = scmp.le.s32.totalorder 1, %s9
      %p112 = scmp.lt.s32.totalorder %s9, 3
      %p113 = pnand %p111, %p112
      %p114 = pneg %p113
      // Predicated region
      $region9: #{stem_forward.1} parent=5 // pred_check
        _
      $region10: #{stem_forward.1} parent=5 // pred_check_branch
        %116 = sbr.rel (%p113) target = $region12
      $region11: #{stem_forward.1} parent=5 // pred_region
        %s117 = ssub.s32 %s9, 1
        // Predicated region
        $region13: #{stem_forward.1} parent=11 // pred_check
          %p118 = pneg %p56
        $region14: #{stem_forward.1} parent=11 // pred_check_branch
          %120 = sbr.rel (%p118) target = $region16
        $region15: #{stem_forward.1} parent=11 // pred_region
          _
        $region16: #{stem_forward.1} parent=11 // pred_fallthru
          _
        // Predicated region
        $region17: #{stem_forward.1} parent=11 // pred_check
          %p121 = pneg %p77
        $region18: #{stem_forward.1} parent=11 // pred_check_branch
          %123 = sbr.rel (%p121) target = $region20
        $region19: #{stem_forward.1} parent=11 // pred_region
          _
        $region20: #{stem_forward.1} parent=11 // pred_fallthru
          _
      $region12: #{stem_forward.1} parent=5 // pred_fallthru
        _
      %p124 = scmp.lt.s32.totalorder %s9, 2
      // Predicated region
      $region21: #{stem_forward.1} parent=5 // pred_check
        %p125 = pneg %p124
      $region22: #{stem_forward.1} parent=5 // pred_check_branch
        %127 = sbr.rel (%p125) target = $region24
      $region23: #{stem_forward.1} parent=5 // pred_region
        // Predicated region
        $region25: #{stem_forward.1} parent=23 // pred_check
          %p128 = pneg %p29
        $region26: #{stem_forward.1} parent=23 // pred_check_branch
          %130 = sbr.rel (%p128) target = $region28
        $region27: #{stem_forward.1} parent=23 // pred_region
          %s131 = sand.u32 %s19, 1
          %s132 = sand.u32 %s19, 1
          %s133 = smul.addr %s132, 12
          %s134 = scalar_lea.vmem [#allocation2], %s133
          %s135 = smul.addr %s9, 4
          %s136 = scalar_lea.vmem %s0, %s135
          // Predicated region
          $region29: #{stem_forward.1} parent=27 // pred_check
            _
          $region30: #{stem_forward.1} parent=27 // pred_check_branch
            %138 = sbr.rel (0) target = $region32
          $region31: #{stem_forward.1} parent=27 // pred_region
            // Predicated region
            $region33: #{stem_forward.1} parent=31 // pred_check
              _
            $region34: #{stem_forward.1} parent=31 // pred_check_branch
              %140 = sbr.rel target = $region36
            $region35: #{stem_forward.1} parent=31 // pred_region
              // Predicated region
              $region48: #{stem_forward.1} parent=35 // pred_check
                _
              $region49: #{stem_forward.1} parent=35 // pred_check_branch
                %160 = sbr.rel (0) target = $region51
              $region50: #{stem_forward.1} parent=35 // pred_region
                loop: start=0, step=1, limit=1
                $region52: #{stem_forward.1} parent=50 // loop_pre_header
                  _
                $region53: #{stem_forward.1} parent=50 // loop_header
                  %s162 = sphi 0, %s166
                  %p163 = scmp.ge.s32.totalorder %s162, 1
                  %s167 = sphi %s136, %s136
                  %s168 = sphi %s134, %s134
                $region54: #{stem_forward.1} parent=50 // loop_header_branch
                  %165 = sbr.rel (%p163) target = $region58
                $region55: #{stem_forward.1} parent=50 // loop_body
                  _
                $region56: #{stem_forward.1} parent=50 // loop_footer
                  %s166 = sadd.s32 1, %s162
                $region57: #{stem_forward.1} parent=50 // loop_footer_branch
                  %161 = sbr.rel target = $region53
                $region58: #{stem_forward.1} parent=50 // loop_exit
                  _
                %s170 = ssub.s32 16, 1
                loop: start=0, step=1, limit=1
                $region59: #{stem_forward.1} parent=50 // loop_pre_header
                  _
                $region60: #{stem_forward.1} parent=50 // loop_header
                  %s172 = sphi 0, %s176
                  %p173 = scmp.ge.s32.totalorder %s172, 1
                  %s177 = sphi %s136, %s136
                  %s178 = sphi %s134, %s134
                $region61: #{stem_forward.1} parent=50 // loop_header_branch
                  %175 = sbr.rel (%p173) target = $region65
                $region62: #{stem_forward.1} parent=50 // loop_body
                  %v179 = vld [vmem:[%s177] sm:%s170]
                  %180 = vst [vmem:[%s178] sm:%s170] %v179
                  %v181 = vld [vmem:[%s177 + $0x8] sm:%s170]
                  %182 = vst [vmem:[%s178 + $0x4] sm:%s170] %v181
                  %v183 = vld [vmem:[%s177 + $0x10] sm:%s170]
                  %184 = vst [vmem:[%s178 + $0x8] sm:%s170] %v183
                $region63: #{stem_forward.1} parent=50 // loop_footer
                  %s176 = sadd.s32 1, %s172
                $region64: #{stem_forward.1} parent=50 // loop_footer_branch
                  %171 = sbr.rel target = $region60
                $region65: #{stem_forward.1} parent=50 // loop_exit
                  _
              $region51: #{stem_forward.1} parent=35 // pred_fallthru
                _
            $region36: #{stem_forward.1} parent=31 // pred_fallthru
              _
            // Predicated region
            $region37: #{stem_forward.1} parent=31 // pred_check
              _
            $region38: #{stem_forward.1} parent=31 // pred_check_branch
              %142 = sbr.rel (0) target = $region40
            $region39: #{stem_forward.1} parent=31 // pred_region
              %s144 = ssub.s32 16, 1
              loop: start=0, step=1, limit=1
              $region41: #{stem_forward.1} parent=39 // loop_pre_header
                _
              $region42: #{stem_forward.1} parent=39 // loop_header
                %s146 = sphi 0, %s150
                %p147 = scmp.ge.s32.totalorder %s146, 1
                %s151 = sphi %s136, %s136
                %s152 = sphi %s134, %s134
              $region43: #{stem_forward.1} parent=39 // loop_header_branch
                %149 = sbr.rel (%p147) target = $region47
              $region44: #{stem_forward.1} parent=39 // loop_body
                %v153 = vld [vmem:[%s151] sm:%s144]
                %154 = vst [vmem:[%s152] sm:%s144] %v153
                %v155 = vld [vmem:[%s151 + $0x8] sm:%s144]
                %156 = vst [vmem:[%s152 + $0x4] sm:%s144] %v155
                %v157 = vld [vmem:[%s151 + $0x10] sm:%s144]
                %158 = vst [vmem:[%s152 + $0x8] sm:%s144] %v157
              $region45: #{stem_forward.1} parent=39 // loop_footer
                %s150 = sadd.s32 1, %s146
              $region46: #{stem_forward.1} parent=39 // loop_footer_branch
                %145 = sbr.rel target = $region42
              $region47: #{stem_forward.1} parent=39 // loop_exit
                _
            $region40: #{stem_forward.1} parent=31 // pred_fallthru
              _
          $region32: #{stem_forward.1} parent=27 // pred_fallthru
            _
          %185 = vnop
        $region28: #{stem_forward.1} parent=23 // pred_fallthru
          _
      $region24: #{stem_forward.1} parent=5 // pred_fallthru
        _
      %p186 = scmp.le.s32.totalorder 1, %s9
      %p187 = scmp.lt.s32.totalorder %s9, 3
      %p188 = pnand %p186, %p187
      %p189 = pneg %p188
      // Predicated region
      $region66: #{stem_forward.1} parent=5 // pred_check
        _
      $region67: #{stem_forward.1} parent=5 // pred_check_branch
        %191 = sbr.rel (%p188) target = $region69
      $region68: #{stem_forward.1} parent=5 // pred_region
        %s192 = ssub.s32 %s9, 1
        %s193 = sand.u32 %s22, 1
        %s194 = sand.u32 %s22, 1
        %s195 = smul.addr %s194, 12
        %s196 = scalar_lea.vmem [#allocation2], %s195
        // Predicated region
        $region70: #{stem_forward.1} parent=68 // pred_check
          %p197 = pneg %p35
        $region71: #{stem_forward.1} parent=68 // pred_check_branch
          %199 = sbr.rel (%p197) target = $region73
        $region72: #{stem_forward.1} parent=68 // pred_region
          _
        $region73: #{stem_forward.1} parent=68 // pred_fallthru
          _
        %s200 = sand.u32 %s22, 1
        %s201 = sand.u32 %s22, 1
        %s202 = smul.addr %s201, 12
        %s203 = scalar_lea.vmem [#allocation2], %s202
        %p204 = pneg %p35
        %p205 = pneg %p32
        %p206 = pneg %p56
        %p207 = pneg %p53
        %p208 = pneg %p77
        %p209 = pneg %p74
        %p210 = pneg %p103
        %p211 = pneg %p100
        %p212 = scmp.lt.s32.totalorder %s14, 1
        %s213 = scalar_select %p212, %s14, 1
        %s214 = smul.addr %s213, 2
        %s215 = smul.addr %s214, 8
        %s216 = scalar_lea.vmem %s3, %s215
        %p217 = scmp.lt.s32.totalorder %s14, 1
        %s218 = scalar_select %p217, %s14, 1
        %s219 = smul.addr %s218, 2
        %s220 = smul.addr %s219, 8
        %s221 = scalar_lea.vmem %s3, %s220
        %v223 = vld [vmem:[%s196] sm:$0xf]
        %v224 = vld [vmem:[%s196 + $0x4] sm:$0xf]
        %v225 = vld [vmem:[%s196 + $0x8] sm:$0x1]
        %v226 = vunpack.c.l.bf16 %v225
        %v227 = vld [vmem:[%s1] sm:$0xf]
        %v229 = vunpack.c.l.b16 %v227
        %v230 = vpack.c.b16 %v229, %v229
        %231 = vrot.lane.b32.xlu0 %v230, 112
        %v232 = vpop.permute.xlu0 %231
        %v235 = vunpack.c.l.b16 %v223
        %v236 = vunpack.c.l.b16 %v224
        %v237 = vpack.c.b16 %v236, %v235
        %vm239 = vcmask 130048
        %v241 = vsel %vm239, %v232, 0
        %243 = vmatprep.subr.bf16.mxu0 0
        %244 = vmatpush1.bf16.msra.mxu0 0
        %245 = vmatprep.subr.bf16.mxu0 0
        %246 = vmatpush1.bf16.msra.mxu0 0
        %247 = vmatprep.subr.bf16.mxu0 0
        %248 = vmatpush1.bf16.msra.mxu0 0
        %249 = vmatprep.subr.bf16.mxu0 0
        %250 = vmatpush1.bf16.msra.mxu0 0
        %251 = vmatprep.subr.bf16.mxu0 0
        %252 = vmatpush1.bf16.msra.mxu0 0
        %253 = vmatprep.subr.bf16.mxu0 0
        %254 = vmatpush1.bf16.msra.mxu0 0
        %255 = vmatprep.subr.bf16.mxu0 0
        %256 = vmatpush1.bf16.msra.mxu0 0
        %257 = vmatprep.subr.bf16.mxu0 0
        %258 = vmatpush1.bf16.msra.mxu0 %v237
        %259 = vmatprep.subr.bf16.mxu0 0
        %260 = vmatpush2.bf16.msra.mxu0 0
        %261 = vmatprep.subr.bf16.mxu0 0
        %262 = vmatpush2.bf16.msra.mxu0 0
        %263 = vmatprep.subr.bf16.mxu0 0
        %264 = vmatpush2.bf16.msra.mxu0 0
        %265 = vmatprep.subr.bf16.mxu0 0
        %266 = vmatpush2.bf16.msra.mxu0 0
        %267 = vmatprep.subr.bf16.mxu0 0
        %268 = vmatpush2.bf16.msra.mxu0 0
        %269 = vmatprep.subr.bf16.mxu0 0
        %270 = vmatpush2.bf16.msra.mxu0 0
        %271 = vmatprep.subr.bf16.mxu0 0
        %272 = vmatpush2.bf16.msra.mxu0 0
        %273 = vmatprep.subr.bf16.mxu0 0
        %274 = vmatpush2.bf16.msra.mxu0 0
        %275 = vmatprep.mubr.bf16.mxu0 0
        %276 = vmatmul.mubr.bf16.gmra.mxu0 %v241
        %v277 = vpop.f32.mrf.mxu0
        %v278 = vadd.f32 0.0, %v277
        %v279 = vpop.f32.mrf.mxu0
        %v280 = vpop.f32.mrf.mxu0
        %v281 = vpop.f32.mrf.mxu0
        %282 = vdwg.mxu0
        %283 = vrot.lane.b32.xlu0 %v278, 127
        %v284 = vpop.permute.xlu0 %283
        %v286 = vsel %vm239, %v227, 0
        %288 = vmatprep.subr.bf16.mxu0 0
        %289 = vmatpush1.bf16.msra.mxu0 0
        %290 = vmatprep.subr.bf16.mxu0 0
        %291 = vmatpush1.bf16.msra.mxu0 0
        %292 = vmatprep.subr.bf16.mxu0 0
        %293 = vmatpush1.bf16.msra.mxu0 0
        %294 = vmatprep.subr.bf16.mxu0 0
        %295 = vmatpush1.bf16.msra.mxu0 0
        %296 = vmatprep.subr.bf16.mxu0 0
        %297 = vmatpush1.bf16.msra.mxu0 0
        %298 = vmatprep.subr.bf16.mxu0 0
        %299 = vmatpush1.bf16.msra.mxu0 0
        %300 = vmatprep.subr.bf16.mxu0 0
        %301 = vmatpush1.bf16.msra.mxu0 0
        %302 = vmatprep.subr.bf16.mxu0 0
        %303 = vmatpush1.bf16.msra.mxu0 %v237
        %304 = vmatprep.subr.bf16.mxu0 0
        %305 = vmatpush2.bf16.msra.mxu0 0
        %306 = vmatprep.subr.bf16.mxu0 0
        %307 = vmatpush2.bf16.msra.mxu0 0
        %308 = vmatprep.subr.bf16.mxu0 0
        %309 = vmatpush2.bf16.msra.mxu0 0
        %310 = vmatprep.subr.bf16.mxu0 0
        %311 = vmatpush2.bf16.msra.mxu0 0
        %312 = vmatprep.subr.bf16.mxu0 0
        %313 = vmatpush2.bf16.msra.mxu0 0
        %314 = vmatprep.subr.bf16.mxu0 0
        %315 = vmatpush2.bf16.msra.mxu0 0
        %316 = vmatprep.subr.bf16.mxu0 0
        %317 = vmatpush2.bf16.msra.mxu0 0
        %318 = vmatprep.subr.bf16.mxu0 0
        %319 = vmatpush2.bf16.msra.mxu0 0
        %320 = vmatprep.mubr.bf16.mxu0 0
        %321 = vmatmul.mubr.bf16.gmra.mxu0 %v286
        %v322 = vpop.f32.mrf.mxu0
        %v323 = vadd.f32 %v284, %v322
        %v324 = vpop.f32.mrf.mxu0
        %v325 = vpop.f32.mrf.mxu0
        %v326 = vpop.f32.mrf.mxu0
        %327 = vdwg.mxu0
        %328 = vrot.lane.b32.xlu0 %v230, 96
        %v329 = vpop.permute.xlu0 %328
        %v331 = vsel %vm239, %v329, 0
        %333 = vmatprep.subr.bf16.mxu0 0
        %334 = vmatpush1.bf16.msra.mxu0 0
        %335 = vmatprep.subr.bf16.mxu0 0
        %336 = vmatpush1.bf16.msra.mxu0 0
        %337 = vmatprep.subr.bf16.mxu0 0
        %338 = vmatpush1.bf16.msra.mxu0 0
        %339 = vmatprep.subr.bf16.mxu0 0
        %340 = vmatpush1.bf16.msra.mxu0 0
        %341 = vmatprep.subr.bf16.mxu0 0
        %342 = vmatpush1.bf16.msra.mxu0 0
        %343 = vmatprep.subr.bf16.mxu0 0
        %344 = vmatpush1.bf16.msra.mxu0 0
        %345 = vmatprep.subr.bf16.mxu0 0
        %346 = vmatpush1.bf16.msra.mxu0 0
        %347 = vmatprep.subr.bf16.mxu0 0
        %348 = vmatpush1.bf16.msra.mxu0 %v237
        %349 = vmatprep.subr.bf16.mxu0 0
        %350 = vmatpush2.bf16.msra.mxu0 0
        %351 = vmatprep.subr.bf16.mxu0 0
        %352 = vmatpush2.bf16.msra.mxu0 0
        %353 = vmatprep.subr.bf16.mxu0 0
        %354 = vmatpush2.bf16.msra.mxu0 0
        %355 = vmatprep.subr.bf16.mxu0 0
        %356 = vmatpush2.bf16.msra.mxu0 0
        %357 = vmatprep.subr.bf16.mxu0 0
        %358 = vmatpush2.bf16.msra.mxu0 0
        %359 = vmatprep.subr.bf16.mxu0 0
        %360 = vmatpush2.bf16.msra.mxu0 0
        %361 = vmatprep.subr.bf16.mxu0 0
        %362 = vmatpush2.bf16.msra.mxu0 0
        %363 = vmatprep.subr.bf16.mxu0 0
        %364 = vmatpush2.bf16.msra.mxu0 0
        %365 = vmatprep.mubr.bf16.mxu0 0
        %366 = vmatmul.mubr.bf16.gmra.mxu0 %v331
        %v367 = vpop.f32.mrf.mxu0
        %v368 = vadd.f32 0.0, %v367
        %v369 = vpop.f32.mrf.mxu0
        %v370 = vpop.f32.mrf.mxu0
        %v371 = vpop.f32.mrf.mxu0
        %372 = vdwg.mxu0
        %373 = vrot.lane.b32.xlu0 %v368, 119
        %v374 = vpop.permute.xlu0 %373
        %v375 = vadd.f32 %v323, %v374
        %376 = vrot.lane.b32.xlu0 %v230, 80
        %v377 = vpop.permute.xlu0 %376
        %v379 = vsel %vm239, %v377, 0
        %381 = vmatprep.subr.bf16.mxu0 0
        %382 = vmatpush1.bf16.msra.mxu0 0
        %383 = vmatprep.subr.bf16.mxu0 0
        %384 = vmatpush1.bf16.msra.mxu0 0
        %385 = vmatprep.subr.bf16.mxu0 0
        %386 = vmatpush1.bf16.msra.mxu0 0
        %387 = vmatprep.subr.bf16.mxu0 0
        %388 = vmatpush1.bf16.msra.mxu0 0
        %389 = vmatprep.subr.bf16.mxu0 0
        %390 = vmatpush1.bf16.msra.mxu0 0
        %391 = vmatprep.subr.bf16.mxu0 0
        %392 = vmatpush1.bf16.msra.mxu0 0
        %393 = vmatprep.subr.bf16.mxu0 0
        %394 = vmatpush1.bf16.msra.mxu0 0
        %395 = vmatprep.subr.bf16.mxu0 0
        %396 = vmatpush1.bf16.msra.mxu0 %v237
        %397 = vmatprep.subr.bf16.mxu0 0
        %398 = vmatpush2.bf16.msra.mxu0 0
        %399 = vmatprep.subr.bf16.mxu0 0
        %400 = vmatpush2.bf16.msra.mxu0 0
        %401 = vmatprep.subr.bf16.mxu0 0
        %402 = vmatpush2.bf16.msra.mxu0 0
        %403 = vmatprep.subr.bf16.mxu0 0
        %404 = vmatpush2.bf16.msra.mxu0 0
        %405 = vmatprep.subr.bf16.mxu0 0
        %406 = vmatpush2.bf16.msra.mxu0 0
        %407 = vmatprep.subr.bf16.mxu0 0
        %408 = vmatpush2.bf16.msra.mxu0 0
        %409 = vmatprep.subr.bf16.mxu0 0
        %410 = vmatpush2.bf16.msra.mxu0 0
        %411 = vmatprep.subr.bf16.mxu0 0
        %412 = vmatpush2.bf16.msra.mxu0 0
        %413 = vmatprep.mubr.bf16.mxu0 0
        %414 = vmatmul.mubr.bf16.gmra.mxu0 %v379
        %v415 = vpop.f32.mrf.mxu0
        %v416 = vadd.f32 0.0, %v415
        %v417 = vpop.f32.mrf.mxu0
        %v418 = vpop.f32.mrf.mxu0
        %v419 = vpop.f32.mrf.mxu0
        %420 = vdwg.mxu0
        %421 = vrot.lane.b32.xlu0 %v416, 118
        %v422 = vpop.permute.xlu0 %421
        %v423 = vadd.f32 %v375, %v422
        %v424 = vld [vmem:[%s2] sm:$0xff]
        %426 = vset.pattern.permute.xlu0 0
        %427 = vperm.xlu0 %426, %v424
        %v428 = vpop.permute.xlu0 %427
        %v430 = vmul.f32 %v423, %v428
        %431 = vset.pattern.permute.xlu0 1
        %432 = vperm.xlu0 %431, %v424
        %v433 = vpop.permute.xlu0 %432
        %v435 = vadd.f32 %v430, %v433
        %v436 = vmul.f32 %v435, %v435
        %v437 = vmul.f32 %v435, %v436
        %v438 = vmul.f32 %v437, 0.044715
        %v439 = vadd.f32 %v435, %v438
        %v440 = vmul.f32 %v439, 0.7978846
        %v441 = vtanh.pop %v440
        %v442 = vadd.f32 %v441, 1.0
        %v443 = vmul.f32 %v442, 0.5
        %v444 = vmul.f32 %v435, %v443
        %v445 = vlaneseq
        %v446 = vshrl.u32 %v445, 7
        %v447 = vsub.s32 0, %v446
        %v448 = vrot.slane %v226, %v447
        %v449 = vmul.f32 %v444, %v448
        %450 = vrot.lane.b32.xlu0 %v449, 10
        %v451 = vpop.permute.xlu0 %450
        %452 = vrot.lane.b32.xlu0 %v449, 9
        %v453 = vpop.permute.xlu0 %452
        %454 = vrot.lane.b32.xlu0 %v449, 8
        %v455 = vpop.permute.xlu0 %454
        %456 = vrot.lane.b32.xlu0 %v449, 1
        %v457 = vpop.permute.xlu0 %456
        %458 = vrot.lane.b32.xlu0 %v449, 127
        %v459 = vpop.permute.xlu0 %458
        %460 = vrot.lane.b32.xlu0 %v449, 120
        %v461 = vpop.permute.xlu0 %460
        %462 = vrot.lane.b32.xlu0 %v449, 119
        %v463 = vpop.permute.xlu0 %462
        %464 = vrot.lane.b32.xlu0 %v449, 118
        %v465 = vpop.permute.xlu0 %464
        %v466 = vpack.c.bf16 %v453, %v451
        %v467 = vpack.c.bf16 %v457, %v455
        %v468 = vpack.c.bf16 %v459, %v449
        %v469 = vpack.c.bf16 %v463, %v461
        %v470 = vpack.c.bf16 %v465, %v465
        %v471 = vld [vmem:[%s1] sm:$0xff]
        %v472 = vld [vmem:[%s1 + $0x8] sm:$0xff]
        %v475 = vunpack.c.l.b16 %v471
        %v476 = vunpack.c.h.b16 %v471
        %v477 = vunpack.c.l.b16 %v472
        %v478 = vunpack.c.h.b16 %v472
        %v479 = vpack.c.b16 %v477, %v475
        %v480 = vpack.c.b16 %v478, %v476
        %481 = vrot.lane.b32.xlu0 %v479, 64
        %v482 = vpop.permute.xlu0 %481
        %483 = vrot.lane.b32.xlu0 %v480, 64
        %v484 = vpop.permute.xlu0 %483
        %vm485 = vcmask 523264
        %v486 = vsel %vm485, %v482, %v484
        %vm487 = vcmask 588800
        %v489 = vsel %vm487, %v486, 0
        %vm491 = vcmask 1043456
        %v493 = vsel %vm491, %v470, 0
        %495 = vmatprep.subr.bf16.mxu0 0
        %496 = vmatpush1.bf16.msra.mxu0 0
        %497 = vmatprep.subr.bf16.mxu0 0
        %498 = vmatpush1.bf16.msra.mxu0 0
        %499 = vmatprep.subr.bf16.mxu0 0
        %500 = vmatpush1.bf16.msra.mxu0 0
        %501 = vmatprep.subr.bf16.mxu0 0
        %502 = vmatpush1.bf16.msra.mxu0 %v493
        %503 = vmatprep.subr.bf16.mxu0 0
        %504 = vmatpush1.bf16.msra.mxu0 %v469
        %505 = vmatprep.subr.bf16.mxu0 0
        %506 = vmatpush1.bf16.msra.mxu0 %v468
        %507 = vmatprep.subr.bf16.mxu0 0
        %508 = vmatpush1.bf16.msra.mxu0 %v467
        %509 = vmatprep.subr.bf16.mxu0 0
        %510 = vmatpush1.bf16.msra.mxu0 %v466
        %511 = vmatprep.subr.bf16.mxu0 0
        %512 = vmatpush2.bf16.msra.mxu0 0
        %513 = vmatprep.subr.bf16.mxu0 0
        %514 = vmatpush2.bf16.msra.mxu0 0
        %515 = vmatprep.subr.bf16.mxu0 0
        %516 = vmatpush2.bf16.msra.mxu0 0
        %517 = vmatprep.subr.bf16.mxu0 0
        %518 = vmatpush2.bf16.msra.mxu0 0
        %519 = vmatprep.subr.bf16.mxu0 0
        %520 = vmatpush2.bf16.msra.mxu0 0
        %521 = vmatprep.subr.bf16.mxu0 0
        %522 = vmatpush2.bf16.msra.mxu0 0
        %523 = vmatprep.subr.bf16.mxu0 0
        %524 = vmatpush2.bf16.msra.mxu0 0
        %525 = vmatprep.subr.bf16.mxu0 0
        %526 = vmatpush2.bf16.msra.mxu0 0
        %527 = vmatprep.mubr.bf16.mxu0 0
        %528 = vmatmul.mubr.bf16.gmra.mxu0 %v489
        %v529 = vpop.f32.mrf.mxu0
        %v530 = vadd.f32 0.0, %v529
        %v531 = vpop.f32.mrf.mxu0
        %v532 = vpop.f32.mrf.mxu0
        %v533 = vadd.f32 0.0, %v532
        %v534 = vpop.f32.mrf.mxu0
        %535 = vdwg.mxu0
        %v536 = vld [vmem:[%s2] sm:$0xff]
        %v537 = vld [vmem:[%s2 + $0x8] sm:$0xff]
        %v538 = vld [vmem:[%s2 + $0x10] sm:$0x1]
        %v539 = vmul.f32 %v530, %v448
        %v540 = vmul.f32 %v533, %v448
        %541 = vadd.xlane.f32.xlu0 %v539
        %v542 = vpop.xlane.xlu0 %541
        %543 = vadd.xlane.f32.xlu0 %v540
        %v544 = vpop.xlane.xlu0 %543
        %v545 = vmul.f32 %v542, 0.015625
        %v546 = vmul.f32 %v544, 0.015625
        %v547 = vmul.f32 %v536, %v545
        %v548 = vmul.f32 %v537, %v546
        %vm549 = vcmask 48144
        %v550 = vsel %vm549, %v547, 0.0
        %v551 = vsel %vm549, %v548, 0.0
        %v552 = vadd.f32 %v550, %v551
        %v553 = vrot.slane %v552, 4
        %v554 = vadd.f32 %v552, %v553
        %v555 = vrot.slane %v554, 2
        %v556 = vadd.f32 %v554, %v555
        %v557 = vrot.slane %v556, 1
        %v558 = vadd.f32 %v556, %v557
        %v559 = vadd.f32 %v558, %v538
        %v560 = vmax.f32 %v559, 0.0
        %v561 = vlaneseq
        %v562 = vshrl.u32 %v561, 7
        %v563 = vsub.s32 0, %v562
        %v564 = vrot.slane %v560, %v563
        %566 = vrot.lane.b32.xlu0 %v564, 4
        %v567 = vpop.permute.xlu0 %566
        %v569 = vmul.f32 %v536, %v567
        %v570 = vmul.f32 %v537, %v567
        %573 = vrot.lane.b32.xlu0 %v569, 122
        %v574 = vpop.permute.xlu0 %573
        %575 = vrot.lane.b32.xlu0 %v570, 122
        %v576 = vpop.permute.xlu0 %575
        %vm579 = vcmask 31744
        %v580 = vsel %vm579, %v574, 0.0
        %581 = vadd.xlane.f32.xlu0 %v580
        %v582 = vpop.xlane.xlu0 %581
        %v583 = vsel %vm579, %v576, 0.0
        %584 = vadd.xlane.f32.xlu0 %v583
        %v585 = vpop.xlane.xlu0 %584
        %v586 = vadd.f32 %v582, %v536
        %v587 = vadd.f32 %v585, %v537
        %v588 = vxor.u32 %v586, 2147483648
        %v589 = vxor.u32 %v587, 2147483648
        %v590 = vmul.f32 %v588, 1.442695
        %v591 = vpow.pop %v590
        %v592 = vmul.f32 %v589, 1.442695
        %v593 = vpow.pop %v592
        %v594 = vadd.f32 %v591, 1.0
        %v595 = vadd.f32 %v593, 1.0
        %v596 = vrcp.pop %v594
        %v597 = vmul.f32 1.0, %v596
        %v598 = vrcp.pop %v595
        %v599 = vmul.f32 1.0, %v598
        %601 = vset.pattern.permute.xlu0 10
        %602 = vperm.xlu0 %601, %v597
        %v603 = vpop.permute.xlu0 %602
        %606 = vset.pattern.permute.xlu0 10
        %607 = vperm.xlu0 %606, %v599
        %v608 = vpop.permute.xlu0 %607
        %v610 = vmul.f32 %v530, %v603
        %v611 = vmul.f32 %v533, %v608
        %612 = vst [vmem:[%s221] sm:$0xff] %v610
        %613 = vst [vmem:[%s221 + $0x8] sm:$0xff] %v611
        %p614 = scmp.lt.s32.totalorder %s14, 1
        %s615 = scalar_select %p614, %s14, 1
        %s616 = smul.addr %s615, 2
        %s617 = smul.addr %s616, 8
        %s618 = scalar_lea.vmem %s3, %s617
        // Predicated region
        $region74: #{stem_forward.1} parent=68 // pred_check
          %p619 = pneg %p100
        $region75: #{stem_forward.1} parent=68 // pred_check_branch
          %621 = sbr.rel (%p619) target = $region77
        $region76: #{stem_forward.1} parent=68 // pred_region
          _
        $region77: #{stem_forward.1} parent=68 // pred_fallthru
          _
      $region69: #{stem_forward.1} parent=5 // pred_fallthru
        _
      %p622 = scmp.le.s32.totalorder 2, %s9
      // Predicated region
      $region78: #{stem_forward.1} parent=5 // pred_check
        %p623 = pneg %p622
      $region79: #{stem_forward.1} parent=5 // pred_check_branch
        %625 = sbr.rel (%p623) target = $region81
      $region80: #{stem_forward.1} parent=5 // pred_region
        %s626 = ssub.s32 %s9, 2
        // Predicated region
        $region82: #{stem_forward.1} parent=80 // pred_check
          %p627 = pneg %p106
        $region83: #{stem_forward.1} parent=80 // pred_check_branch
          %629 = sbr.rel (%p627) target = $region85
        $region84: #{stem_forward.1} parent=80 // pred_region
          %p630 = scmp.lt.s32.totalorder %s15, 1
          %s631 = scalar_select %p630, %s15, 1
          %s632 = smul.addr %s631, 2
          %s633 = smul.addr %s632, 8
          %s634 = scalar_lea.vmem %s3, %s633
        $region85: #{stem_forward.1} parent=80 // pred_fallthru
          _
      $region81: #{stem_forward.1} parent=5 // pred_fallthru
        _
    $region6: #{stem_forward.1} parent=1 // loop_footer
      %s13 = sadd.s32 1, %s9
    $region7: #{stem_forward.1} parent=1 // loop_footer_branch
      %8 = sbr.rel target = $region3
    $region8: #{stem_forward.1} parent=1 // loop_exit
      _

</llo_original>
